<compile_context>
chip_gen: v7x
topology: tpu7x:2x2x1
jax: 0.10.0
libtpu: 0.0.40
codegen_flags: <defaults>
</compile_context>

<pallas_src>
import jax
import jax.numpy as jnp
from jax.experimental import pallas as pl
from jax.experimental.pallas import tpu as pltpu

IN_FEATURES = 100
HIDDEN = 256
OUT_FEATURES = 784
DROPOUT_P = 0.1

K_PAD = 128      # 100 -> 128  (lane-aligned contraction dim)
OUT_PAD = 896    # 784 -> 896  (7 * 128, lane-dense output stores)
TILE_B_MAX = 512 # keeps double-buffered tiles well inside v5e's 16 MiB /
                 # v7x's 32 MiB scoped-VMEM defaults


def _round_up(n, m):
    return ((n + m - 1) // m) * m


def _generator_kernel(x_ref, mask_ref, w1_ref, b1_ref, w2_ref, b2_ref, o_ref):
    # ---- hidden layer: Linear(100->256) + ReLU (bf16 MXU, f32 accumulate) --
    h = jnp.dot(x_ref[...].astype(jnp.bfloat16), w1_ref[...],
                preferred_element_type=jnp.float32)            # (TB, 256)
    h = jnp.maximum(h + b1_ref[...], 0.0)

    # ---- Dropout(p=0.1): mask is 0 or 1/(1-p) (all-ones in eval mode) ------
    h = h * mask_ref[...]

    # ---- output layer: Linear(256->784pad) + Tanh --------------------------
    y = jnp.dot(h.astype(jnp.bfloat16), w2_ref[...],
                preferred_element_type=jnp.float32)            # (TB, 896)
    o_ref[...] = jnp.tanh(y + b2_ref[...])


def generator_forward(x, params, *, key=None, training=True):
    """Generator forward pass.  x: (B, 100) f32.  Returns (B, 784) f32."""
    B = x.shape[0]
    tile_b = min(TILE_B_MAX, _round_up(B, 8))
    b_pad = _round_up(B, tile_b)
    n_tiles = b_pad // tile_b

    # Dropout mask (inverted scaling), generated outside the kernel.
    if training:
        if key is None:
            key = jax.random.PRNGKey(0)
        keep = jax.random.bernoulli(key, 1.0 - DROPOUT_P, (B, HIDDEN))
        mask = keep.astype(jnp.float32) * (1.0 / (1.0 - DROPOUT_P))
    else:
        mask = jnp.ones((B, HIDDEN), jnp.float32)

    # Pad to lane/sublane-aligned shapes; weights pre-cast to bf16.
    x_p = jnp.pad(x.astype(jnp.float32),
                  ((0, b_pad - B), (0, K_PAD - IN_FEATURES)))
    mask_p = jnp.pad(mask, ((0, b_pad - B), (0, 0)))
    w1_p = jnp.pad(params["w1"].astype(jnp.bfloat16),
                   ((0, K_PAD - IN_FEATURES), (0, 0)))               # (128, 256)
    b1 = params["b1"].astype(jnp.float32).reshape(1, HIDDEN)
    w2_p = jnp.pad(params["w2"].astype(jnp.bfloat16),
                   ((0, 0), (0, OUT_PAD - OUT_FEATURES)))            # (256, 896)
    b2_p = jnp.pad(params["b2"].astype(jnp.float32).reshape(1, OUT_FEATURES),
                   ((0, 0), (0, OUT_PAD - OUT_FEATURES)))            # (1, 896)

    flops = 2 * b_pad * (K_PAD * HIDDEN + HIDDEN * OUT_PAD)
    bytes_accessed = (x_p.size * 4 + mask_p.size * 4 + w1_p.size * 2 +
                      b1.size * 4 + w2_p.size * 2 + b2_p.size * 4 +
                      b_pad * OUT_PAD * 4)

    out_p = pl.pallas_call(
        _generator_kernel,
        out_shape=jax.ShapeDtypeStruct((b_pad, OUT_PAD), jnp.float32),
        grid=(n_tiles,),
        in_specs=[
            pl.BlockSpec((tile_b, K_PAD), lambda i: (i, 0)),    # x tile
            pl.BlockSpec((tile_b, HIDDEN), lambda i: (i, 0)),   # dropout mask
            pl.BlockSpec((K_PAD, HIDDEN), lambda i: (0, 0)),    # w1 (resident)
            pl.BlockSpec((1, HIDDEN), lambda i: (0, 0)),        # b1 (resident)
            pl.BlockSpec((HIDDEN, OUT_PAD), lambda i: (0, 0)),  # w2 (resident)
            pl.BlockSpec((1, OUT_PAD), lambda i: (0, 0)),       # b2 (resident)
        ],
        out_specs=pl.BlockSpec((tile_b, OUT_PAD), lambda i: (i, 0)),
        compiler_params=pltpu.CompilerParams(
            dimension_semantics=("parallel",)),
        cost_estimate=pl.CostEstimate(
            flops=flops,
            transcendentals=b_pad * OUT_PAD,
            bytes_accessed=bytes_accessed),
    )(x_p, mask_p, w1_p, b1, w2_p, b2_p)

    return out_p[:B, :OUT_FEATURES]


def init_params(key):
    """Deterministic init mirroring nn.Linear's U(-1/sqrt(fan_in), 1/sqrt(fan_in))."""
    k1, k2, k3, k4 = jax.random.split(key, 4)
    lim1 = 1.0 / jnp.sqrt(jnp.float32(IN_FEATURES))
    lim2 = 1.0 / jnp.sqrt(jnp.float32(HIDDEN))
    # Weights stored pre-transposed: (in, out), so kernel computes x @ W + b.
    w1 = jax.random.uniform(k1, (IN_FEATURES, HIDDEN), jnp.float32, -lim1, lim1)
    b1 = jax.random.uniform(k2, (1, HIDDEN), jnp.float32, -lim1, lim1)
    w2 = jax.random.uniform(k3, (HIDDEN, OUT_FEATURES), jnp.float32, -lim2, lim2)
    b2 = jax.random.uniform(k4, (1, OUT_FEATURES), jnp.float32, -lim2, lim2)
    return {"w1": w1, "b1": b1, "w2": w2, "b2": b2}


def _ref_forward(x, params, mask):
    """Plain-JAX reference with matching bf16 matmul precision."""
    h = jnp.dot(x.astype(jnp.bfloat16), params["w1"].astype(jnp.bfloat16),
                preferred_element_type=jnp.float32) + params["b1"]
    h = jnp.maximum(h, 0.0) * mask
    y = jnp.dot(h.astype(jnp.bfloat16), params["w2"].astype(jnp.bfloat16),
                preferred_element_type=jnp.float32) + params["b2"]
    return jnp.tanh(y)


if __name__ == "__main__":
    key = jax.random.PRNGKey(0)
    pkey, xkey, dkey = jax.random.split(key, 3)

    params = init_params(pkey)
    B = 8
    x = jax.random.normal(xkey, (B, IN_FEATURES), dtype=jnp.float32)

    # Training-mode forward (dropout active), like a fresh PyTorch module.
    out_train = generator_forward(x, params, key=dkey, training=True)
    jax.block_until_ready(out_train)

    # Eval-mode forward (dropout disabled).
    out_eval = generator_forward(x, params, training=False)
    jax.block_until_ready(out_eval)

    # References using the exact same dropout mask / bf16 matmul precision.
    keep = jax.random.bernoulli(dkey, 1.0 - DROPOUT_P, (B, HIDDEN))
    mask = keep.astype(jnp.float32) * (1.0 / (1.0 - DROPOUT_P))
    ref_train = _ref_forward(x, params, mask)
    ref_eval = _ref_forward(x, params, jnp.ones((B, HIDDEN), jnp.float32))

    assert out_train.shape == (B, OUT_FEATURES)
    assert out_eval.shape == (B, OUT_FEATURES)
    assert jnp.allclose(out_eval, ref_eval, atol=5e-3, rtol=5e-3)
    assert jnp.allclose(out_train, ref_train, atol=5e-3, rtol=5e-3)
    # Tanh output must lie in [-1, 1].
    assert float(jnp.max(jnp.abs(out_train))) <= 1.0 + 1e-6

    print("KERNEL_OK")
</pallas_src>

<mosaic_0001>
module attributes {stable_mosaic.version = 11 : i64} {
  func.func @_generator_kernel(%arg0: i32, %arg1: memref<8x128xf32, #tpu.memory_space<vmem>>, %arg2: memref<8x256xf32, #tpu.memory_space<vmem>>, %arg3: memref<128x256xbf16, #tpu.memory_space<vmem>>, %arg4: memref<1x256xf32, #tpu.memory_space<vmem>>, %arg5: memref<256x896xbf16, #tpu.memory_space<vmem>>, %arg6: memref<1x896xf32, #tpu.memory_space<vmem>>, %arg7: memref<8x896xf32, #tpu.memory_space<vmem>>) attributes {dimension_semantics = [#tpu.dimension_semantics<parallel>], iteration_bounds = array<i64: 1>, scalar_prefetch = 0 : i64, scratch_operands = 0 : i64, tpu.core_type = #tpu.core_type<tc>, window_params = [{transform_indices = @transform_0, window_bounds = array<i64: 8, 128>}, {transform_indices = @transform_1, window_bounds = array<i64: 8, 256>}, {pipeline_mode = #tpu.pipeline_mode<synchronous>, transform_indices = @transform_2, window_bounds = array<i64: 128, 256>}, {pipeline_mode = #tpu.pipeline_mode<synchronous>, transform_indices = @transform_3, window_bounds = array<i64: 1, 256>}, {pipeline_mode = #tpu.pipeline_mode<synchronous>, transform_indices = @transform_4, window_bounds = array<i64: 256, 896>}, {pipeline_mode = #tpu.pipeline_mode<synchronous>, transform_indices = @transform_5, window_bounds = array<i64: 1, 896>}, {transform_indices = @transform_6, window_bounds = array<i64: 8, 896>}]} {
    %c0 = arith.constant 0 : index
    %c0_0 = arith.constant 0 : index
    %0 = vector.load %arg1[%c0, %c0_0] : memref<8x128xf32, #tpu.memory_space<vmem>>, vector<8x128xf32>
    %1 = arith.truncf %0 : vector<8x128xf32> to vector<8x128xbf16>
    %c0_1 = arith.constant 0 : index
    %c0_2 = arith.constant 0 : index
    %2 = vector.load %arg3[%c0_1, %c0_2] : memref<128x256xbf16, #tpu.memory_space<vmem>>, vector<128x256xbf16>
    %cst = arith.constant dense<0.000000e+00> : vector<8x256xf32>
    %3 = tpu.matmul %1, %2, %cst {dimension_numbers = #tpu.dot_dimension_numbers<[1], [0], [0], [1], [0, 0, 1, 1], [], []>} : vector<8x128xbf16>, vector<128x256xbf16>, vector<8x256xf32> -> vector<8x256xf32>
    %c0_3 = arith.constant 0 : index
    %c0_4 = arith.constant 0 : index
    %4 = vector.load %arg4[%c0_3, %c0_4] : memref<1x256xf32, #tpu.memory_space<vmem>>, vector<1x256xf32>
    %5 = vector.broadcast %4 : vector<1x256xf32> to vector<8x256xf32>
    %6 = arith.addf %3, %5 : vector<8x256xf32>
    %cst_5 = arith.constant 0.000000e+00 : f32
    %7 = vector.broadcast %cst_5 : f32 to vector<8x256xf32>
    %8 = arith.maximumf %6, %7 : vector<8x256xf32>
    %c0_6 = arith.constant 0 : index
    %c0_7 = arith.constant 0 : index
    %9 = vector.load %arg2[%c0_6, %c0_7] : memref<8x256xf32, #tpu.memory_space<vmem>>, vector<8x256xf32>
    %10 = arith.mulf %8, %9 : vector<8x256xf32>
    %11 = arith.truncf %10 : vector<8x256xf32> to vector<8x256xbf16>
    %c0_8 = arith.constant 0 : index
    %c0_9 = arith.constant 0 : index
    %12 = vector.load %arg5[%c0_8, %c0_9] : memref<256x896xbf16, #tpu.memory_space<vmem>>, vector<256x896xbf16>
    %cst_10 = arith.constant dense<0.000000e+00> : vector<8x896xf32>
    %13 = tpu.matmul %11, %12, %cst_10 {dimension_numbers = #tpu.dot_dimension_numbers<[1], [0], [0], [1], [0, 0, 1, 1], [], []>} : vector<8x256xbf16>, vector<256x896xbf16>, vector<8x896xf32> -> vector<8x896xf32>
    %c0_11 = arith.constant 0 : index
    %c0_12 = arith.constant 0 : index
    %14 = vector.load %arg6[%c0_11, %c0_12] : memref<1x896xf32, #tpu.memory_space<vmem>>, vector<1x896xf32>
    %15 = vector.broadcast %14 : vector<1x896xf32> to vector<8x896xf32>
    %16 = arith.addf %13, %15 : vector<8x896xf32>
    %17 = math.tanh %16 : vector<8x896xf32>
    %c0_13 = arith.constant 0 : index
    %c0_14 = arith.constant 0 : index
    %18 = vector.load %arg7[%c0_13, %c0_14] : memref<8x896xf32, #tpu.memory_space<vmem>>, vector<8x896xf32>
    tpu.vector_store %arg7[%c0_13, %c0_14], %17 {strides = array<i32>} : memref<8x896xf32, #tpu.memory_space<vmem>>, vector<8x896xf32>,
    return
  }
  func.func @transform_0(%arg0: i32) -> (i32, i32) {
    %c0_i32 = arith.constant 0 : i32
    %c0_i32_0 = arith.constant 0 : i32
    return %arg0, %c0_i32 : i32, i32
  }
  func.func @transform_1(%arg0: i32) -> (i32, i32) {
    %c0_i32 = arith.constant 0 : i32
    %c0_i32_0 = arith.constant 0 : i32
    return %arg0, %c0_i32 : i32, i32
  }
  func.func @transform_2(%arg0: i32) -> (i32, i32) {
    %c0_i32 = arith.constant 0 : i32
    %c0_i32_0 = arith.constant 0 : i32
    %c0_i32_1 = arith.constant 0 : i32
    return %c0_i32, %c0_i32_0 : i32, i32
  }
  func.func @transform_3(%arg0: i32) -> (i32, i32) {
    %c0_i32 = arith.constant 0 : i32
    %c0_i32_0 = arith.constant 0 : i32
    %c0_i32_1 = arith.constant 0 : i32
    return %c0_i32, %c0_i32_0 : i32, i32
  }
  func.func @transform_4(%arg0: i32) -> (i32, i32) {
    %c0_i32 = arith.constant 0 : i32
    %c0_i32_0 = arith.constant 0 : i32
    %c0_i32_1 = arith.constant 0 : i32
    return %c0_i32, %c0_i32_0 : i32, i32
  }
  func.func @transform_5(%arg0: i32) -> (i32, i32) {
    %c0_i32 = arith.constant 0 : i32
    %c0_i32_0 = arith.constant 0 : i32
    %c0_i32_1 = arith.constant 0 : i32
    return %c0_i32, %c0_i32_0 : i32, i32
  }
  func.func @transform_6(%arg0: i32) -> (i32, i32) {
    %c0_i32 = arith.constant 0 : i32
    %c0_i32_0 = arith.constant 0 : i32
    return %arg0, %c0_i32 : i32, i32
  }
}

</mosaic_0001>

<llo_original>
// kernel: tpu_custom_call.1
$region0: #{tpu_custom_call.1}
  #allocation0 [shape = 'u32[]', space=smem, size = 0x4, offset = 0x4, fixed_abs, tag = 'smem constant byte address 0x4 - core index']
  #allocation1 [shape = 'u32[144,128]{1,0:T(1,128)}', space=vmem, size = 0x12000, scoped, tag = 'internal scratch']
  %s0 = inlined_call_operand.hbm [shape: f32[8,128], index: 0, kind: input, shape index: {}]
  %s1 = inlined_call_operand.hbm [shape: f32[8,256], index: 1, kind: input, shape index: {}]
  %s2 = inlined_call_operand.hbm [shape: bf16[128,256], index: 2, kind: input, shape index: {}]
  %s3 = inlined_call_operand.vmem [shape: f32[1,256], index: 3, kind: input, shape index: {}]
  %s4 = inlined_call_operand.hbm [shape: bf16[256,896], index: 4, kind: input, shape index: {}]
  %s5 = inlined_call_operand.vmem [shape: f32[1,896], index: 5, kind: input, shape index: {}]
  %s6 = inlined_call_operand.hbm [shape: f32[8,896], index: 6, kind: output, shape index: {}]
  %s7 = sld [smem:[#allocation0]]
  $region50: #{tpu_custom_call.1} parent=0
    _
  %s9 = ssub.s32 1, %s7
  %s10 = scalar_select 0, %s9, %s7
  $region1: #{tpu_custom_call.1} parent=0
    #allocation2 [shape = 'u8[4096]{0}', space=vmem, size = 0x1000, scoped, tag = 'input window, operand 0, single buffered']
    #allocation3 [shape = 's32[1]{0}', space=sflag, size = 0x4, scoped, tag = 'scoped memory for tpu_custom_call.1']
    #allocation4 [shape = 's32[1]{0}', space=sflag, size = 0x4, scoped, tag = 'scoped memory for tpu_custom_call.1']
    #allocation5 [shape = 'u8[8192]{0}', space=vmem, size = 0x2000, scoped, tag = 'input window, operand 1, single buffered']
    #allocation6 [shape = 's32[1]{0}', space=sflag, size = 0x4, scoped, tag = 'scoped memory for tpu_custom_call.1']
    #allocation7 [shape = 'u8[65536]{0}', space=vmem, size = 0x10000, scoped, tag = 'input window, operand 2, single buffered']
    #allocation8 [shape = 'u8[458752]{0}', space=vmem, size = 0x70000, scoped, tag = 'input window, operand 4, single buffered']
    #allocation9 [shape = 's32[1]{0}', space=sflag, size = 0x4, scoped, tag = 'scoped memory for tpu_custom_call.1']
    #allocation10 [shape = 'u8[28672]{0}', space=vmem, size = 0x7000, scoped, tag = 'output window, operand 0, single buffered']
    %11 = vsyncpa [#allocation3], 0
    %12 = vsyncpa [#allocation6], 0
    %13 = vsyncpa [#allocation9], 0
    %14 = vsyncpa [#allocation4], 0
    // Predicated region
    $region2: #{tpu_custom_call.1} parent=1 // pred_check
      _
    $region3: #{tpu_custom_call.1} parent=1 // pred_check_branch
      %16 = sbr.rel (0) target = $region5
    $region4: #{tpu_custom_call.1} parent=1 // pred_region
      %s18 = ssub.s32 128, 128
      %19 = vsyncadd [#allocation3], %s18
      %s21 = sshll.u32 [#allocation2], 4
      %s22 = int_to_ptr.vmem [resolvable:$true] %s21
      %24 = dma.hbm_to_vmem [thread:$0]  %s0, 128, %s22, [#allocation3]
    $region5: #{tpu_custom_call.1} parent=1 // pred_fallthru
      _
    // Predicated region
    $region6: #{tpu_custom_call.1} parent=1 // pred_check
      _
    $region7: #{tpu_custom_call.1} parent=1 // pred_check_branch
      %26 = sbr.rel (0) target = $region9
    $region8: #{tpu_custom_call.1} parent=1 // pred_region
      %s28 = ssub.s32 256, 256
      %29 = vsyncadd [#allocation6], %s28
      %s31 = sshll.u32 [#allocation5], 4
      %s32 = int_to_ptr.vmem [resolvable:$true] %s31
      %34 = dma.hbm_to_vmem [thread:$0]  %s1, 256, %s32, [#allocation6]
    $region9: #{tpu_custom_call.1} parent=1 // pred_fallthru
      _
    // Predicated region
    $region10: #{tpu_custom_call.1} parent=1 // pred_check
      _
    $region11: #{tpu_custom_call.1} parent=1 // pred_check_branch
      %36 = sbr.rel (0) target = $region13
    $region12: #{tpu_custom_call.1} parent=1 // pred_region
      %s38 = ssub.s32 2048, 2048
      %39 = vsyncadd [#allocation6], %s38
      %s40 = sshll.u32 [#allocation7], 4
      %s41 = int_to_ptr.vmem [resolvable:$true] %s40
      %46 = dma.hbm_to_vmem [thread:$0]  %s2, 2048, %s41, [#allocation6], 128, 128, 8
    $region13: #{tpu_custom_call.1} parent=1 // pred_fallthru
      _
    // Predicated region
    $region14: #{tpu_custom_call.1} parent=1 // pred_check
      _
    $region15: #{tpu_custom_call.1} parent=1 // pred_check_branch
      %48 = sbr.rel (0) target = $region17
    $region16: #{tpu_custom_call.1} parent=1 // pred_region
      _
    $region17: #{tpu_custom_call.1} parent=1 // pred_fallthru
      _
    // Predicated region
    $region18: #{tpu_custom_call.1} parent=1 // pred_check
      _
    $region19: #{tpu_custom_call.1} parent=1 // pred_check_branch
      %50 = sbr.rel (0) target = $region21
    $region20: #{tpu_custom_call.1} parent=1 // pred_region
      %s52 = ssub.s32 14336, 14336
      %53 = vsyncadd [#allocation9], %s52
      %s54 = sshll.u32 [#allocation8], 4
      %s55 = int_to_ptr.vmem [resolvable:$true] %s54
      %60 = dma.hbm_to_vmem [thread:$0]  %s4, 14336, %s55, [#allocation9], 448, 448, 28
    $region21: #{tpu_custom_call.1} parent=1 // pred_fallthru
      _
    // Predicated region
    $region22: #{tpu_custom_call.1} parent=1 // pred_check
      _
    $region23: #{tpu_custom_call.1} parent=1 // pred_check_branch
      %62 = sbr.rel (0) target = $region25
    $region24: #{tpu_custom_call.1} parent=1 // pred_region
      _
    $region25: #{tpu_custom_call.1} parent=1 // pred_fallthru
      _
    // Predicated region
    $region26: #{tpu_custom_call.1} parent=1 // pred_check
      _
    $region27: #{tpu_custom_call.1} parent=1 // pred_check_branch
      %64 = sbr.rel (0) target = $region29
    $region28: #{tpu_custom_call.1} parent=1 // pred_region
      %65 = dma.done [#allocation3], 128
    $region29: #{tpu_custom_call.1} parent=1 // pred_fallthru
      _
    // Predicated region
    $region30: #{tpu_custom_call.1} parent=1 // pred_check
      _
    $region31: #{tpu_custom_call.1} parent=1 // pred_check_branch
      %67 = sbr.rel (0) target = $region33
    $region32: #{tpu_custom_call.1} parent=1 // pred_region
      %68 = dma.done [#allocation6], 256
    $region33: #{tpu_custom_call.1} parent=1 // pred_fallthru
      _
    // Predicated region
    $region34: #{tpu_custom_call.1} parent=1 // pred_check
      _
    $region35: #{tpu_custom_call.1} parent=1 // pred_check_branch
      %70 = sbr.rel (0) target = $region37
    $region36: #{tpu_custom_call.1} parent=1 // pred_region
      %71 = dma.done [#allocation6], 2048
    $region37: #{tpu_custom_call.1} parent=1 // pred_fallthru
      _
    // Predicated region
    $region38: #{tpu_custom_call.1} parent=1 // pred_check
      _
    $region39: #{tpu_custom_call.1} parent=1 // pred_check_branch
      %73 = sbr.rel (0) target = $region41
    $region40: #{tpu_custom_call.1} parent=1 // pred_region
      %74 = dma.done [#allocation9], 14336
    $region41: #{tpu_custom_call.1} parent=1 // pred_fallthru
      _
    %v76 = vld [vmem:[#allocation2] sm:$0xff]
    %v77 = vpack.c.bf16 %v76, %v76
    %v78 = vld [vmem:[#allocation7] sm:$0xff]
    %v79 = vld [vmem:[#allocation7 + $0x8] sm:$0xff]
    %v80 = vld [vmem:[#allocation7 + $0x10] sm:$0xff]
    %v81 = vld [vmem:[#allocation7 + $0x18] sm:$0xff]
    %v82 = vld [vmem:[#allocation7 + $0x20] sm:$0xff]
    %v83 = vld [vmem:[#allocation7 + $0x28] sm:$0xff]
    %v84 = vld [vmem:[#allocation7 + $0x30] sm:$0xff]
    %v85 = vld [vmem:[#allocation7 + $0x38] sm:$0xff]
    %v86 = vld [vmem:[#allocation7 + $0x40] sm:$0xff]
    %v87 = vld [vmem:[#allocation7 + $0x48] sm:$0xff]
    %v88 = vld [vmem:[#allocation7 + $0x50] sm:$0xff]
    %v89 = vld [vmem:[#allocation7 + $0x58] sm:$0xff]
    %v90 = vld [vmem:[#allocation7 + $0x60] sm:$0xff]
    %v91 = vld [vmem:[#allocation7 + $0x68] sm:$0xff]
    %v92 = vld [vmem:[#allocation7 + $0x70] sm:$0xff]
    %v93 = vld [vmem:[#allocation7 + $0x78] sm:$0xff]
    %v94 = vld [vmem:[%s3] sm:$0x3]
    %v96 = vlaneseq
    %v97 = vshrl.u32 %v96, 7
    %v98 = vsub.s32 0, %v97
    %v99 = vrot.slane %v94, %v98
    %v100 = vlaneseq
    %v101 = vshrl.u32 %v100, 7
    %v102 = vsub.s32 1, %v101
    %v103 = vrot.slane %v94, %v102
    %v122 = vunpack.c.l.b16 %v78
    %v123 = vunpack.c.h.b16 %v78
    %v124 = vunpack.c.l.b16 %v79
    %v125 = vunpack.c.h.b16 %v79
    %v126 = vunpack.c.l.b16 %v80
    %v127 = vunpack.c.h.b16 %v80
    %v128 = vunpack.c.l.b16 %v81
    %v129 = vunpack.c.h.b16 %v81
    %v130 = vunpack.c.l.b16 %v82
    %v131 = vunpack.c.h.b16 %v82
    %v132 = vunpack.c.l.b16 %v83
    %v133 = vunpack.c.h.b16 %v83
    %v134 = vunpack.c.l.b16 %v84
    %v135 = vunpack.c.h.b16 %v84
    %v136 = vunpack.c.l.b16 %v85
    %v137 = vunpack.c.h.b16 %v85
    %v138 = vunpack.c.l.b16 %v86
    %v139 = vunpack.c.h.b16 %v86
    %v140 = vunpack.c.l.b16 %v87
    %v141 = vunpack.c.h.b16 %v87
    %v142 = vunpack.c.l.b16 %v88
    %v143 = vunpack.c.h.b16 %v88
    %v144 = vunpack.c.l.b16 %v89
    %v145 = vunpack.c.h.b16 %v89
    %v146 = vunpack.c.l.b16 %v90
    %v147 = vunpack.c.h.b16 %v90
    %v148 = vunpack.c.l.b16 %v91
    %v149 = vunpack.c.h.b16 %v91
    %v150 = vunpack.c.l.b16 %v92
    %v151 = vunpack.c.h.b16 %v92
    %v152 = vunpack.c.l.b16 %v93
    %v153 = vunpack.c.h.b16 %v93
    %v154 = vpack.c.b16 %v124, %v122
    %v155 = vpack.c.b16 %v125, %v123
    %v156 = vpack.c.b16 %v128, %v126
    %v157 = vpack.c.b16 %v129, %v127
    %v158 = vpack.c.b16 %v132, %v130
    %v159 = vpack.c.b16 %v133, %v131
    %v160 = vpack.c.b16 %v136, %v134
    %v161 = vpack.c.b16 %v137, %v135
    %v162 = vpack.c.b16 %v140, %v138
    %v163 = vpack.c.b16 %v141, %v139
    %v164 = vpack.c.b16 %v144, %v142
    %v165 = vpack.c.b16 %v145, %v143
    %v166 = vpack.c.b16 %v148, %v146
    %v167 = vpack.c.b16 %v149, %v147
    %v168 = vpack.c.b16 %v152, %v150
    %v169 = vpack.c.b16 %v153, %v151
    %186 = vmatprep.subr.bf16.mxu0 %v155
    %187 = vmatpush1.bf16.msra.mxu0 %v154
    %188 = vmatprep.subr.bf16.mxu0 %v157
    %189 = vmatpush1.bf16.msra.mxu0 %v156
    %190 = vmatprep.subr.bf16.mxu0 %v159
    %191 = vmatpush1.bf16.msra.mxu0 %v158
    %192 = vmatprep.subr.bf16.mxu0 %v161
    %193 = vmatpush1.bf16.msra.mxu0 %v160
    %194 = vmatprep.subr.bf16.mxu0 %v163
    %195 = vmatpush1.bf16.msra.mxu0 %v162
    %196 = vmatprep.subr.bf16.mxu0 %v165
    %197 = vmatpush1.bf16.msra.mxu0 %v164
    %198 = vmatprep.subr.bf16.mxu0 %v167
    %199 = vmatpush1.bf16.msra.mxu0 %v166
    %200 = vmatprep.subr.bf16.mxu0 %v169
    %201 = vmatpush1.bf16.msra.mxu0 %v168
    %202 = vmatprep.subr.bf16.mxu0 0
    %203 = vmatpush1.bf16.msra.mxu0 0
    %204 = vmatprep.subr.bf16.mxu0 0
    %205 = vmatpush1.bf16.msra.mxu0 0
    %206 = vmatprep.subr.bf16.mxu0 0
    %207 = vmatpush1.bf16.msra.mxu0 0
    %208 = vmatprep.subr.bf16.mxu0 0
    %209 = vmatpush1.bf16.msra.mxu0 0
    %210 = vmatprep.subr.bf16.mxu0 0
    %211 = vmatpush1.bf16.msra.mxu0 0
    %212 = vmatprep.subr.bf16.mxu0 0
    %213 = vmatpush1.bf16.msra.mxu0 0
    %214 = vmatprep.subr.bf16.mxu0 0
    %215 = vmatpush1.bf16.msra.mxu0 0
    %216 = vmatprep.subr.bf16.mxu0 0
    %217 = vmatpush1.bf16.msra.mxu0 0
    %218 = vmatprep.mubr.bf16.mxu0 0
    %219 = vmatmul.mubr.bf16.gmra.mrb[0].mxu0 %v77
    %v220 = vpop.f32.mrb[0].mxu0
    %v221 = vadd.f32 %v99, %v220
    %v222 = vpop.f32.mrb[0].mxu0
    %v223 = vadd.f32 %v103, %v222
    %v224 = vpop.f32.mrb[0].mxu0
    %v225 = vpop.f32.mrb[0].mxu0
    %226 = vdwg.mxu0
    %v227 = vmax.f32 %v221, 0.0
    %v228 = vmax.f32 %v223, 0.0
    %v229 = vld [vmem:[#allocation5] sm:$0xff]
    %v230 = vld [vmem:[#allocation5 + $0x8] sm:$0xff]
    %v231 = vmul.f32 %v227, %v229
    %v232 = vmul.f32 %v228, %v230
    %v233 = vpack.c.bf16 %v231, %v231
    %v234 = vpack.c.bf16 %v232, %v232
    %v235 = vld [vmem:[#allocation8] sm:$0xff]
    %v236 = vld [vmem:[#allocation8 + $0x8] sm:$0xff]
    %v237 = vld [vmem:[#allocation8 + $0x10] sm:$0xff]
    %v238 = vld [vmem:[#allocation8 + $0x18] sm:$0xf]
    %v239 = vld [vmem:[#allocation8 + $0x1c] sm:$0xff]
    %v240 = vld [vmem:[#allocation8 + $0x24] sm:$0xff]
    %v241 = vld [vmem:[#allocation8 + $0x2c] sm:$0xff]
    %v242 = vld [vmem:[#allocation8 + $0x34] sm:$0xf]
    %v243 = vld [vmem:[#allocation8 + $0x38] sm:$0xff]
    %v244 = vld [vmem:[#allocation8 + $0x40] sm:$0xff]
    %v245 = vld [vmem:[#allocation8 + $0x48] sm:$0xff]
    %v246 = vld [vmem:[#allocation8 + $0x50] sm:$0xf]
    %v247 = vld [vmem:[#allocation8 + $0x54] sm:$0xff]
    %v248 = vld [vmem:[#allocation8 + $0x5c] sm:$0xff]
    %v249 = vld [vmem:[#allocation8 + $0x64] sm:$0xff]
    %v250 = vld [vmem:[#allocation8 + $0x6c] sm:$0xf]
    %v251 = vld [vmem:[#allocation8 + $0x70] sm:$0xff]
    %v252 = vld [vmem:[#allocation8 + $0x78] sm:$0xff]
    %v253 = vld [vmem:[#allocation8 + $0x80] sm:$0xff]
    %v254 = vld [vmem:[#allocation8 + $0x88] sm:$0xf]
    %v255 = vld [vmem:[#allocation8 + $0x8c] sm:$0xff]
    %v256 = vld [vmem:[#allocation8 + $0x94] sm:$0xff]
    %v257 = vld [vmem:[#allocation8 + $0x9c] sm:$0xff]
    %v258 = vld [vmem:[#allocation8 + $0xa4] sm:$0xf]
    %v259 = vld [vmem:[#allocation8 + $0xa8] sm:$0xff]
    %v260 = vld [vmem:[#allocation8 + $0xb0] sm:$0xff]
    %v261 = vld [vmem:[#allocation8 + $0xb8] sm:$0xff]
    %v262 = vld [vmem:[#allocation8 + $0xc0] sm:$0xf]
    %v263 = vld [vmem:[#allocation8 + $0xc4] sm:$0xff]
    %v264 = vld [vmem:[#allocation8 + $0xcc] sm:$0xff]
    %v265 = vld [vmem:[#allocation8 + $0xd4] sm:$0xff]
    %v266 = vld [vmem:[#allocation8 + $0xdc] sm:$0xf]
    %v267 = vld [vmem:[#allocation8 + $0xe0] sm:$0xff]
    %v268 = vld [vmem:[#allocation8 + $0xe8] sm:$0xff]
    %v269 = vld [vmem:[#allocation8 + $0xf0] sm:$0xff]
    %v270 = vld [vmem:[#allocation8 + $0xf8] sm:$0xf]
    %v271 = vld [vmem:[#allocation8 + $0xfc] sm:$0xff]
    %v272 = vld [vmem:[#allocation8 + $0x104] sm:$0xff]
    %v273 = vld [vmem:[#allocation8 + $0x10c] sm:$0xff]
    %v274 = vld [vmem:[#allocation8 + $0x114] sm:$0xf]
    %v275 = vld [vmem:[#allocation8 + $0x118] sm:$0xff]
    %v276 = vld [vmem:[#allocation8 + $0x120] sm:$0xff]
    %v277 = vld [vmem:[#allocation8 + $0x128] sm:$0xff]
    %v278 = vld [vmem:[#allocation8 + $0x130] sm:$0xf]
    %v279 = vld [vmem:[#allocation8 + $0x134] sm:$0xff]
    %v280 = vld [vmem:[#allocation8 + $0x13c] sm:$0xff]
    %v281 = vld [vmem:[#allocation8 + $0x144] sm:$0xff]
    %v282 = vld [vmem:[#allocation8 + $0x14c] sm:$0xf]
    %v283 = vld [vmem:[#allocation8 + $0x150] sm:$0xff]
    %v284 = vld [vmem:[#allocation8 + $0x158] sm:$0xff]
    %v285 = vld [vmem:[#allocation8 + $0x160] sm:$0xff]
    %v286 = vld [vmem:[#allocation8 + $0x168] sm:$0xf]
    %v287 = vld [vmem:[#allocation8 + $0x16c] sm:$0xff]
    %v288 = vld [vmem:[#allocation8 + $0x174] sm:$0xff]
    %v289 = vld [vmem:[#allocation8 + $0x17c] sm:$0xff]
    %v290 = vld [vmem:[#allocation8 + $0x184] sm:$0xf]
    %v291 = vld [vmem:[#allocation8 + $0x188] sm:$0xff]
    %v292 = vld [vmem:[#allocation8 + $0x190] sm:$0xff]
    %v293 = vld [vmem:[#allocation8 + $0x198] sm:$0xff]
    %v294 = vld [vmem:[#allocation8 + $0x1a0] sm:$0xf]
    %v295 = vld [vmem:[#allocation8 + $0x1a4] sm:$0xff]
    %v296 = vld [vmem:[#allocation8 + $0x1ac] sm:$0xff]
    %v297 = vld [vmem:[#allocation8 + $0x1b4] sm:$0xff]
    %v298 = vld [vmem:[#allocation8 + $0x1bc] sm:$0xf]
    %v299 = vld [vmem:[#allocation8 + $0x1c0] sm:$0xff]
    %v300 = vld [vmem:[#allocation8 + $0x1c8] sm:$0xff]
    %v301 = vld [vmem:[#allocation8 + $0x1d0] sm:$0xff]
    %v302 = vld [vmem:[#allocation8 + $0x1d8] sm:$0xf]
    %v303 = vld [vmem:[#allocation8 + $0x1dc] sm:$0xff]
    %v304 = vld [vmem:[#allocation8 + $0x1e4] sm:$0xff]
    %v305 = vld [vmem:[#allocation8 + $0x1ec] sm:$0xff]
    %v306 = vld [vmem:[#allocation8 + $0x1f4] sm:$0xf]
    %v307 = vld [vmem:[#allocation8 + $0x1f8] sm:$0xff]
    %v308 = vld [vmem:[#allocation8 + $0x200] sm:$0xff]
    %v309 = vld [vmem:[#allocation8 + $0x208] sm:$0xff]
    %v310 = vld [vmem:[#allocation8 + $0x210] sm:$0xf]
    %v311 = vld [vmem:[#allocation8 + $0x214] sm:$0xff]
    %v312 = vld [vmem:[#allocation8 + $0x21c] sm:$0xff]
    %v313 = vld [vmem:[#allocation8 + $0x224] sm:$0xff]
    %v314 = vld [vmem:[#allocation8 + $0x22c] sm:$0xf]
    %v315 = vld [vmem:[#allocation8 + $0x230] sm:$0xff]
    %v316 = vld [vmem:[#allocation8 + $0x238] sm:$0xff]
    %v317 = vld [vmem:[#allocation8 + $0x240] sm:$0xff]
    %v318 = vld [vmem:[#allocation8 + $0x248] sm:$0xf]
    %v319 = vld [vmem:[#allocation8 + $0x24c] sm:$0xff]
    %v320 = vld [vmem:[#allocation8 + $0x254] sm:$0xff]
    %v321 = vld [vmem:[#allocation8 + $0x25c] sm:$0xff]
    %v322 = vld [vmem:[#allocation8 + $0x264] sm:$0xf]
    %v323 = vld [vmem:[#allocation8 + $0x268] sm:$0xff]
    %v324 = vld [vmem:[#allocation8 + $0x270] sm:$0xff]
    %v325 = vld [vmem:[#allocation8 + $0x278] sm:$0xff]
    %v326 = vld [vmem:[#allocation8 + $0x280] sm:$0xf]
    %v327 = vld [vmem:[#allocation8 + $0x284] sm:$0xff]
    %v328 = vld [vmem:[#allocation8 + $0x28c] sm:$0xff]
    %v329 = vld [vmem:[#allocation8 + $0x294] sm:$0xff]
    %v330 = vld [vmem:[#allocation8 + $0x29c] sm:$0xf]
    %v331 = vld [vmem:[#allocation8 + $0x2a0] sm:$0xff]
    %v332 = vld [vmem:[#allocation8 + $0x2a8] sm:$0xff]
    %v333 = vld [vmem:[#allocation8 + $0x2b0] sm:$0xff]
    %v334 = vld [vmem:[#allocation8 + $0x2b8] sm:$0xf]
    %v335 = vld [vmem:[#allocation8 + $0x2bc] sm:$0xff]
    %v336 = vld [vmem:[#allocation8 + $0x2c4] sm:$0xff]
    %v337 = vld [vmem:[#allocation8 + $0x2cc] sm:$0xff]
    %v338 = vld [vmem:[#allocation8 + $0x2d4] sm:$0xf]
    %v339 = vld [vmem:[#allocation8 + $0x2d8] sm:$0xff]
    %v340 = vld [vmem:[#allocation8 + $0x2e0] sm:$0xff]
    %v341 = vld [vmem:[#allocation8 + $0x2e8] sm:$0xff]
    %v342 = vld [vmem:[#allocation8 + $0x2f0] sm:$0xf]
    %v343 = vld [vmem:[#allocation8 + $0x2f4] sm:$0xff]
    %v344 = vld [vmem:[#allocation8 + $0x2fc] sm:$0xff]
    %v345 = vld [vmem:[#allocation8 + $0x304] sm:$0xff]
    %v346 = vld [vmem:[#allocation8 + $0x30c] sm:$0xf]
    %v347 = vld [vmem:[#allocation8 + $0x310] sm:$0xff]
    %v348 = vld [vmem:[#allocation8 + $0x318] sm:$0xff]
    %v349 = vld [vmem:[#allocation8 + $0x320] sm:$0xff]
    %v350 = vld [vmem:[#allocation8 + $0x328] sm:$0xf]
    %v351 = vld [vmem:[#allocation8 + $0x32c] sm:$0xff]
    %v352 = vld [vmem:[#allocation8 + $0x334] sm:$0xff]
    %v353 = vld [vmem:[#allocation8 + $0x33c] sm:$0xff]
    %v354 = vld [vmem:[#allocation8 + $0x344] sm:$0xf]
    %v355 = vld [vmem:[#allocation8 + $0x348] sm:$0xff]
    %v356 = vld [vmem:[#allocation8 + $0x350] sm:$0xff]
    %v357 = vld [vmem:[#allocation8 + $0x358] sm:$0xff]
    %v358 = vld [vmem:[#allocation8 + $0x360] sm:$0xf]
    %v359 = vld [vmem:[#allocation8 + $0x364] sm:$0xff]
    %v360 = vld [vmem:[#allocation8 + $0x36c] sm:$0xff]
    %v361 = vld [vmem:[#allocation8 + $0x374] sm:$0xff]
    %v362 = vld [vmem:[#allocation8 + $0x37c] sm:$0xf]
    %v363 = vld [vmem:[%s5] sm:$0xff]
    %v365 = vlaneseq
    %v366 = vshrl.u32 %v365, 7
    %v367 = vsub.s32 0, %v366
    %v368 = vrot.slane %v363, %v367
    %v369 = vlaneseq
    %v370 = vshrl.u32 %v369, 7
    %v371 = vsub.s32 1, %v370
    %v372 = vrot.slane %v363, %v371
    %v373 = vlaneseq
    %v374 = vshrl.u32 %v373, 7
    %v375 = vsub.s32 2, %v374
    %v376 = vrot.slane %v363, %v375
    %v377 = vlaneseq
    %v378 = vshrl.u32 %v377, 7
    %v379 = vsub.s32 3, %v378
    %v380 = vrot.slane %v363, %v379
    %v381 = vlaneseq
    %v382 = vshrl.u32 %v381, 7
    %v383 = vsub.s32 4, %v382
    %v384 = vrot.slane %v363, %v383
    %v385 = vlaneseq
    %v386 = vshrl.u32 %v385, 7
    %v387 = vsub.s32 5, %v386
    %v388 = vrot.slane %v363, %v387
    %v389 = vlaneseq
    %v390 = vshrl.u32 %v389, 7
    %v391 = vsub.s32 6, %v390
    %v392 = vrot.slane %v363, %v391
    %v528 = vunpack.c.l.b16 %v235
    %v529 = vunpack.c.h.b16 %v235
    %v530 = vunpack.c.l.b16 %v236
    %v531 = vunpack.c.h.b16 %v236
    %v532 = vunpack.c.l.b16 %v237
    %v533 = vunpack.c.h.b16 %v237
    %v534 = vunpack.c.l.b16 %v238
    %v535 = vunpack.c.l.b16 %v239
    %v536 = vunpack.c.h.b16 %v239
    %v537 = vunpack.c.l.b16 %v240
    %v538 = vunpack.c.h.b16 %v240
    %v539 = vunpack.c.l.b16 %v241
    %v540 = vunpack.c.h.b16 %v241
    %v541 = vunpack.c.l.b16 %v242
    %v542 = vunpack.c.l.b16 %v243
    %v543 = vunpack.c.h.b16 %v243
    %v544 = vunpack.c.l.b16 %v244
    %v545 = vunpack.c.h.b16 %v244
    %v546 = vunpack.c.l.b16 %v245
    %v547 = vunpack.c.h.b16 %v245
    %v548 = vunpack.c.l.b16 %v246
    %v549 = vunpack.c.l.b16 %v247
    %v550 = vunpack.c.h.b16 %v247
    %v551 = vunpack.c.l.b16 %v248
    %v552 = vunpack.c.h.b16 %v248
    %v553 = vunpack.c.l.b16 %v249
    %v554 = vunpack.c.h.b16 %v249
    %v555 = vunpack.c.l.b16 %v250
    %v556 = vunpack.c.l.b16 %v251
    %v557 = vunpack.c.h.b16 %v251
    %v558 = vunpack.c.l.b16 %v252
    %v559 = vunpack.c.h.b16 %v252
    %v560 = vunpack.c.l.b16 %v253
    %v561 = vunpack.c.h.b16 %v253
    %v562 = vunpack.c.l.b16 %v254
    %v563 = vunpack.c.l.b16 %v255
    %v564 = vunpack.c.h.b16 %v255
    %v565 = vunpack.c.l.b16 %v256
    %v566 = vunpack.c.h.b16 %v256
    %v567 = vunpack.c.l.b16 %v257
    %v568 = vunpack.c.h.b16 %v257
    %v569 = vunpack.c.l.b16 %v258
    %v570 = vunpack.c.l.b16 %v259
    %v571 = vunpack.c.h.b16 %v259
    %v572 = vunpack.c.l.b16 %v260
    %v573 = vunpack.c.h.b16 %v260
    %v574 = vunpack.c.l.b16 %v261
    %v575 = vunpack.c.h.b16 %v261
    %v576 = vunpack.c.l.b16 %v262
    %v577 = vunpack.c.l.b16 %v263
    %v578 = vunpack.c.h.b16 %v263
    %v579 = vunpack.c.l.b16 %v264
    %v580 = vunpack.c.h.b16 %v264
    %v581 = vunpack.c.l.b16 %v265
    %v582 = vunpack.c.h.b16 %v265
    %v583 = vunpack.c.l.b16 %v266
    %v584 = vunpack.c.l.b16 %v267
    %v585 = vunpack.c.h.b16 %v267
    %v586 = vunpack.c.l.b16 %v268
    %v587 = vunpack.c.h.b16 %v268
    %v588 = vunpack.c.l.b16 %v269
    %v589 = vunpack.c.h.b16 %v269
    %v590 = vunpack.c.l.b16 %v270
    %v591 = vunpack.c.l.b16 %v271
    %v592 = vunpack.c.h.b16 %v271
    %v593 = vunpack.c.l.b16 %v272
    %v594 = vunpack.c.h.b16 %v272
    %v595 = vunpack.c.l.b16 %v273
    %v596 = vunpack.c.h.b16 %v273
    %v597 = vunpack.c.l.b16 %v274
    %v598 = vunpack.c.l.b16 %v275
    %v599 = vunpack.c.h.b16 %v275
    %v600 = vunpack.c.l.b16 %v276
    %v601 = vunpack.c.h.b16 %v276
    %v602 = vunpack.c.l.b16 %v277
    %v603 = vunpack.c.h.b16 %v277
    %v604 = vunpack.c.l.b16 %v278
    %v605 = vunpack.c.l.b16 %v279
    %v606 = vunpack.c.h.b16 %v279
    %v607 = vunpack.c.l.b16 %v280
    %v608 = vunpack.c.h.b16 %v280
    %v609 = vunpack.c.l.b16 %v281
    %v610 = vunpack.c.h.b16 %v281
    %v611 = vunpack.c.l.b16 %v282
    %v612 = vunpack.c.l.b16 %v283
    %v613 = vunpack.c.h.b16 %v283
    %v614 = vunpack.c.l.b16 %v284
    %v615 = vunpack.c.h.b16 %v284
    %v616 = vunpack.c.l.b16 %v285
    %v617 = vunpack.c.h.b16 %v285
    %v618 = vunpack.c.l.b16 %v286
    %v619 = vunpack.c.l.b16 %v287
    %v620 = vunpack.c.h.b16 %v287
    %v621 = vunpack.c.l.b16 %v288
    %v622 = vunpack.c.h.b16 %v288
    %v623 = vunpack.c.l.b16 %v289
    %v624 = vunpack.c.h.b16 %v289
    %v625 = vunpack.c.l.b16 %v290
    %v626 = vunpack.c.l.b16 %v291
    %v627 = vunpack.c.h.b16 %v291
    %v628 = vunpack.c.l.b16 %v292
    %v629 = vunpack.c.h.b16 %v292
    %v630 = vunpack.c.l.b16 %v293
    %v631 = vunpack.c.h.b16 %v293
    %v632 = vunpack.c.l.b16 %v294
    %v633 = vunpack.c.l.b16 %v295
    %v634 = vunpack.c.h.b16 %v295
    %v635 = vunpack.c.l.b16 %v296
    %v636 = vunpack.c.h.b16 %v296
    %v637 = vunpack.c.l.b16 %v297
    %v638 = vunpack.c.h.b16 %v297
    %v639 = vunpack.c.l.b16 %v298
    %v640 = vunpack.c.l.b16 %v299
    %v641 = vunpack.c.h.b16 %v299
    %v642 = vunpack.c.l.b16 %v300
    %v643 = vunpack.c.h.b16 %v300
    %v644 = vunpack.c.l.b16 %v301
    %v645 = vunpack.c.h.b16 %v301
    %v646 = vunpack.c.l.b16 %v302
    %v647 = vunpack.c.l.b16 %v303
    %v648 = vunpack.c.h.b16 %v303
    %v649 = vunpack.c.l.b16 %v304
    %v650 = vunpack.c.h.b16 %v304
    %v651 = vunpack.c.l.b16 %v305
    %v652 = vunpack.c.h.b16 %v305
    %v653 = vunpack.c.l.b16 %v306
    %v654 = vunpack.c.l.b16 %v307
    %v655 = vunpack.c.h.b16 %v307
    %v656 = vunpack.c.l.b16 %v308
    %v657 = vunpack.c.h.b16 %v308
    %v658 = vunpack.c.l.b16 %v309
    %v659 = vunpack.c.h.b16 %v309
    %v660 = vunpack.c.l.b16 %v310
    %v661 = vunpack.c.l.b16 %v311
    %v662 = vunpack.c.h.b16 %v311
    %v663 = vunpack.c.l.b16 %v312
    %v664 = vunpack.c.h.b16 %v312
    %v665 = vunpack.c.l.b16 %v313
    %v666 = vunpack.c.h.b16 %v313
    %v667 = vunpack.c.l.b16 %v314
    %v668 = vunpack.c.l.b16 %v315
    %v669 = vunpack.c.h.b16 %v315
    %v670 = vunpack.c.l.b16 %v316
    %v671 = vunpack.c.h.b16 %v316
    %v672 = vunpack.c.l.b16 %v317
    %v673 = vunpack.c.h.b16 %v317
    %v674 = vunpack.c.l.b16 %v318
    %v675 = vunpack.c.l.b16 %v319
    %v676 = vunpack.c.h.b16 %v319
    %v677 = vunpack.c.l.b16 %v320
    %v678 = vunpack.c.h.b16 %v320
    %v679 = vunpack.c.l.b16 %v321
    %v680 = vunpack.c.h.b16 %v321
    %v681 = vunpack.c.l.b16 %v322
    %v682 = vunpack.c.l.b16 %v323
    %v683 = vunpack.c.h.b16 %v323
    %v684 = vunpack.c.l.b16 %v324
    %v685 = vunpack.c.h.b16 %v324
    %v686 = vunpack.c.l.b16 %v325
    %v687 = vunpack.c.h.b16 %v325
    %v688 = vunpack.c.l.b16 %v326
    %v689 = vunpack.c.l.b16 %v327
    %v690 = vunpack.c.h.b16 %v327
    %v691 = vunpack.c.l.b16 %v328
    %v692 = vunpack.c.h.b16 %v328
    %v693 = vunpack.c.l.b16 %v329
    %v694 = vunpack.c.h.b16 %v329
    %v695 = vunpack.c.l.b16 %v330
    %v696 = vunpack.c.l.b16 %v331
    %v697 = vunpack.c.h.b16 %v331
    %v698 = vunpack.c.l.b16 %v332
    %v699 = vunpack.c.h.b16 %v332
    %v700 = vunpack.c.l.b16 %v333
    %v701 = vunpack.c.h.b16 %v333
    %v702 = vunpack.c.l.b16 %v334
    %v703 = vunpack.c.l.b16 %v335
    %v704 = vunpack.c.h.b16 %v335
    %v705 = vunpack.c.l.b16 %v336
    %v706 = vunpack.c.h.b16 %v336
    %v707 = vunpack.c.l.b16 %v337
    %v708 = vunpack.c.h.b16 %v337
    %v709 = vunpack.c.l.b16 %v338
    %v710 = vunpack.c.l.b16 %v339
    %v711 = vunpack.c.h.b16 %v339
    %v712 = vunpack.c.l.b16 %v340
    %v713 = vunpack.c.h.b16 %v340
    %v714 = vunpack.c.l.b16 %v341
    %v715 = vunpack.c.h.b16 %v341
    %v716 = vunpack.c.l.b16 %v342
    %v717 = vunpack.c.l.b16 %v343
    %v718 = vunpack.c.h.b16 %v343
    %v719 = vunpack.c.l.b16 %v344
    %v720 = vunpack.c.h.b16 %v344
    %v721 = vunpack.c.l.b16 %v345
    %v722 = vunpack.c.h.b16 %v345
    %v723 = vunpack.c.l.b16 %v346
    %v724 = vunpack.c.l.b16 %v347
    %v725 = vunpack.c.h.b16 %v347
    %v726 = vunpack.c.l.b16 %v348
    %v727 = vunpack.c.h.b16 %v348
    %v728 = vunpack.c.l.b16 %v349
    %v729 = vunpack.c.h.b16 %v349
    %v730 = vunpack.c.l.b16 %v350
    %v731 = vunpack.c.l.b16 %v351
    %v732 = vunpack.c.h.b16 %v351
    %v733 = vunpack.c.l.b16 %v352
    %v734 = vunpack.c.h.b16 %v352
    %v735 = vunpack.c.l.b16 %v353
    %v736 = vunpack.c.h.b16 %v353
    %v737 = vunpack.c.l.b16 %v354
    %v738 = vunpack.c.l.b16 %v355
    %v739 = vunpack.c.h.b16 %v355
    %v740 = vunpack.c.l.b16 %v356
    %v741 = vunpack.c.h.b16 %v356
    %v742 = vunpack.c.l.b16 %v357
    %v743 = vunpack.c.h.b16 %v357
    %v744 = vunpack.c.l.b16 %v358
    %v745 = vunpack.c.l.b16 %v359
    %v746 = vunpack.c.h.b16 %v359
    %v747 = vunpack.c.l.b16 %v360
    %v748 = vunpack.c.h.b16 %v360
    %v749 = vunpack.c.l.b16 %v361
    %v750 = vunpack.c.h.b16 %v361
    %v751 = vunpack.c.l.b16 %v362
    %v752 = vpack.c.b16 %v535, %v528
    %v753 = vpack.c.b16 %v536, %v529
    %v754 = vpack.c.b16 %v537, %v530
    %v755 = vpack.c.b16 %v538, %v531
    %v756 = vpack.c.b16 %v539, %v532
    %v757 = vpack.c.b16 %v540, %v533
    %v758 = vpack.c.b16 %v541, %v534
    %v759 = vpack.c.b16 %v549, %v542
    %v760 = vpack.c.b16 %v550, %v543
    %v761 = vpack.c.b16 %v551, %v544
    %v762 = vpack.c.b16 %v552, %v545
    %v763 = vpack.c.b16 %v553, %v546
    %v764 = vpack.c.b16 %v554, %v547
    %v765 = vpack.c.b16 %v555, %v548
    %v766 = vpack.c.b16 %v563, %v556
    %v767 = vpack.c.b16 %v564, %v557
    %v768 = vpack.c.b16 %v565, %v558
    %v769 = vpack.c.b16 %v566, %v559
    %v770 = vpack.c.b16 %v567, %v560
    %v771 = vpack.c.b16 %v568, %v561
    %v772 = vpack.c.b16 %v569, %v562
    %v773 = vpack.c.b16 %v577, %v570
    %v774 = vpack.c.b16 %v578, %v571
    %v775 = vpack.c.b16 %v579, %v572
    %v776 = vpack.c.b16 %v580, %v573
    %v777 = vpack.c.b16 %v581, %v574
    %v778 = vpack.c.b16 %v582, %v575
    %v779 = vpack.c.b16 %v583, %v576
    %v780 = vpack.c.b16 %v591, %v584
    %v781 = vpack.c.b16 %v592, %v585
    %v782 = vpack.c.b16 %v593, %v586
    %v783 = vpack.c.b16 %v594, %v587
    %v784 = vpack.c.b16 %v595, %v588
    %v785 = vpack.c.b16 %v596, %v589
    %v786 = vpack.c.b16 %v597, %v590
    %v787 = vpack.c.b16 %v605, %v598
    %v788 = vpack.c.b16 %v606, %v599
    %v789 = vpack.c.b16 %v607, %v600
    %v790 = vpack.c.b16 %v608, %v601
    %v791 = vpack.c.b16 %v609, %v602
    %v792 = vpack.c.b16 %v610, %v603
    %v793 = vpack.c.b16 %v611, %v604
    %v794 = vpack.c.b16 %v619, %v612
    %v795 = vpack.c.b16 %v620, %v613
    %v796 = vpack.c.b16 %v621, %v614
    %v797 = vpack.c.b16 %v622, %v615
    %v798 = vpack.c.b16 %v623, %v616
    %v799 = vpack.c.b16 %v624, %v617
    %v800 = vpack.c.b16 %v625, %v618
    %v801 = vpack.c.b16 %v633, %v626
    %v802 = vpack.c.b16 %v634, %v627
    %v803 = vpack.c.b16 %v635, %v628
    %v804 = vpack.c.b16 %v636, %v629
    %v805 = vpack.c.b16 %v637, %v630
    %v806 = vpack.c.b16 %v638, %v631
    %v807 = vpack.c.b16 %v639, %v632
    %v808 = vpack.c.b16 %v647, %v640
    %v809 = vpack.c.b16 %v648, %v641
    %v810 = vpack.c.b16 %v649, %v642
    %v811 = vpack.c.b16 %v650, %v643
    %v812 = vpack.c.b16 %v651, %v644
    %v813 = vpack.c.b16 %v652, %v645
    %v814 = vpack.c.b16 %v653, %v646
    %v815 = vpack.c.b16 %v661, %v654
    %v816 = vpack.c.b16 %v662, %v655
    %v817 = vpack.c.b16 %v663, %v656
    %v818 = vpack.c.b16 %v664, %v657
    %v819 = vpack.c.b16 %v665, %v658
    %v820 = vpack.c.b16 %v666, %v659
    %v821 = vpack.c.b16 %v667, %v660
    %v822 = vpack.c.b16 %v675, %v668
    %v823 = vpack.c.b16 %v676, %v669
    %v824 = vpack.c.b16 %v677, %v670
    %v825 = vpack.c.b16 %v678, %v671
    %v826 = vpack.c.b16 %v679, %v672
    %v827 = vpack.c.b16 %v680, %v673
    %v828 = vpack.c.b16 %v681, %v674
    %v829 = vpack.c.b16 %v689, %v682
    %v830 = vpack.c.b16 %v690, %v683
    %v831 = vpack.c.b16 %v691, %v684
    %v832 = vpack.c.b16 %v692, %v685
    %v833 = vpack.c.b16 %v693, %v686
    %v834 = vpack.c.b16 %v694, %v687
    %v835 = vpack.c.b16 %v695, %v688
    %v836 = vpack.c.b16 %v703, %v696
    %v837 = vpack.c.b16 %v704, %v697
    %v838 = vpack.c.b16 %v705, %v698
    %v839 = vpack.c.b16 %v706, %v699
    %v840 = vpack.c.b16 %v707, %v700
    %v841 = vpack.c.b16 %v708, %v701
    %v842 = vpack.c.b16 %v709, %v702
    %v843 = vpack.c.b16 %v717, %v710
    %v844 = vpack.c.b16 %v718, %v711
    %v845 = vpack.c.b16 %v719, %v712
    %v846 = vpack.c.b16 %v720, %v713
    %v847 = vpack.c.b16 %v721, %v714
    %v848 = vpack.c.b16 %v722, %v715
    %v849 = vpack.c.b16 %v723, %v716
    %v850 = vpack.c.b16 %v731, %v724
    %v851 = vpack.c.b16 %v732, %v725
    %v852 = vpack.c.b16 %v733, %v726
    %v853 = vpack.c.b16 %v734, %v727
    %v854 = vpack.c.b16 %v735, %v728
    %v855 = vpack.c.b16 %v736, %v729
    %v856 = vpack.c.b16 %v737, %v730
    %v857 = vpack.c.b16 %v745, %v738
    %v858 = vpack.c.b16 %v746, %v739
    %v859 = vpack.c.b16 %v747, %v740
    %v860 = vpack.c.b16 %v748, %v741
    %v861 = vpack.c.b16 %v749, %v742
    %v862 = vpack.c.b16 %v750, %v743
    %v863 = vpack.c.b16 %v751, %v744
    %976 = vmatprep.subr.bf16.mxu0 %v753
    %977 = vmatpush1.bf16.msra.mxu0 %v752
    %978 = vmatprep.subr.bf16.mxu0 %v760
    %979 = vmatpush1.bf16.msra.mxu0 %v759
    %980 = vmatprep.subr.bf16.mxu0 %v767
    %981 = vmatpush1.bf16.msra.mxu0 %v766
    %982 = vmatprep.subr.bf16.mxu0 %v774
    %983 = vmatpush1.bf16.msra.mxu0 %v773
    %984 = vmatprep.subr.bf16.mxu0 %v781
    %985 = vmatpush1.bf16.msra.mxu0 %v780
    %986 = vmatprep.subr.bf16.mxu0 %v788
    %987 = vmatpush1.bf16.msra.mxu0 %v787
    %988 = vmatprep.subr.bf16.mxu0 %v795
    %989 = vmatpush1.bf16.msra.mxu0 %v794
    %990 = vmatprep.subr.bf16.mxu0 %v802
    %991 = vmatpush1.bf16.msra.mxu0 %v801
    %992 = vmatprep.subr.bf16.mxu0 %v809
    %993 = vmatpush1.bf16.msra.mxu0 %v808
    %994 = vmatprep.subr.bf16.mxu0 %v816
    %995 = vmatpush1.bf16.msra.mxu0 %v815
    %996 = vmatprep.subr.bf16.mxu0 %v823
    %997 = vmatpush1.bf16.msra.mxu0 %v822
    %998 = vmatprep.subr.bf16.mxu0 %v830
    %999 = vmatpush1.bf16.msra.mxu0 %v829
    %1000 = vmatprep.subr.bf16.mxu0 %v837
    %1001 = vmatpush1.bf16.msra.mxu0 %v836
    %1002 = vmatprep.subr.bf16.mxu0 %v844
    %1003 = vmatpush1.bf16.msra.mxu0 %v843
    %1004 = vmatprep.subr.bf16.mxu0 %v851
    %1005 = vmatpush1.bf16.msra.mxu0 %v850
    %1006 = vmatprep.subr.bf16.mxu0 %v858
    %1007 = vmatpush1.bf16.msra.mxu0 %v857
    %1008 = vmatprep.mubr.bf16.mxu0 %v234
    %1009 = vmatmul.mubr.bf16.gmra.mrb[0].mxu0 %v233
    %v1010 = vpop.f32.mrb[0].mxu0
    %v1011 = vadd.f32 %v368, %v1010
    %v1012 = vpop.f32.mrb[0].mxu0
    %v1013 = vadd.f32 %v372, %v1012
    %v1014 = vpop.f32.mrb[0].mxu0
    %v1015 = vpop.f32.mrb[0].mxu0
    %1016 = vdwg.mxu0
    %1017 = vmatprep.subr.bf16.mxu0 %v755
    %1018 = vmatpush1.bf16.msra.mxu0 %v754
    %1019 = vmatprep.subr.bf16.mxu0 %v762
    %1020 = vmatpush1.bf16.msra.mxu0 %v761
    %1021 = vmatprep.subr.bf16.mxu0 %v769
    %1022 = vmatpush1.bf16.msra.mxu0 %v768
    %1023 = vmatprep.subr.bf16.mxu0 %v776
    %1024 = vmatpush1.bf16.msra.mxu0 %v775
    %1025 = vmatprep.subr.bf16.mxu0 %v783
    %1026 = vmatpush1.bf16.msra.mxu0 %v782
    %1027 = vmatprep.subr.bf16.mxu0 %v790
    %1028 = vmatpush1.bf16.msra.mxu0 %v789
    %1029 = vmatprep.subr.bf16.mxu0 %v797
    %1030 = vmatpush1.bf16.msra.mxu0 %v796
    %1031 = vmatprep.subr.bf16.mxu0 %v804
    %1032 = vmatpush1.bf16.msra.mxu0 %v803
    %1033 = vmatprep.subr.bf16.mxu0 %v811
    %1034 = vmatpush1.bf16.msra.mxu0 %v810
    %1035 = vmatprep.subr.bf16.mxu0 %v818
    %1036 = vmatpush1.bf16.msra.mxu0 %v817
    %1037 = vmatprep.subr.bf16.mxu0 %v825
    %1038 = vmatpush1.bf16.msra.mxu0 %v824
    %1039 = vmatprep.subr.bf16.mxu0 %v832
    %1040 = vmatpush1.bf16.msra.mxu0 %v831
    %1041 = vmatprep.subr.bf16.mxu0 %v839
    %1042 = vmatpush1.bf16.msra.mxu0 %v838
    %1043 = vmatprep.subr.bf16.mxu0 %v846
    %1044 = vmatpush1.bf16.msra.mxu0 %v845
    %1045 = vmatprep.subr.bf16.mxu0 %v853
    %1046 = vmatpush1.bf16.msra.mxu0 %v852
    %1047 = vmatprep.subr.bf16.mxu0 %v860
    %1048 = vmatpush1.bf16.msra.mxu0 %v859
    %1049 = vmatprep.mubr.bf16.mxu0 %v234
    %1050 = vmatmul.mubr.bf16.gmra.mrb[0].mxu0 %v233
    %v1051 = vpop.f32.mrb[0].mxu0
    %v1052 = vadd.f32 %v376, %v1051
    %v1053 = vpop.f32.mrb[0].mxu0
    %v1054 = vadd.f32 %v380, %v1053
    %v1055 = vpop.f32.mrb[0].mxu0
    %v1056 = vpop.f32.mrb[0].mxu0
    %1057 = vdwg.mxu0
    %1058 = vmatprep.subr.bf16.mxu0 %v757
    %1059 = vmatpush1.bf16.msra.mxu0 %v756
    %1060 = vmatprep.subr.bf16.mxu0 %v764
    %1061 = vmatpush1.bf16.msra.mxu0 %v763
    %1062 = vmatprep.subr.bf16.mxu0 %v771
    %1063 = vmatpush1.bf16.msra.mxu0 %v770
    %1064 = vmatprep.subr.bf16.mxu0 %v778
    %1065 = vmatpush1.bf16.msra.mxu0 %v777
    %1066 = vmatprep.subr.bf16.mxu0 %v785
    %1067 = vmatpush1.bf16.msra.mxu0 %v784
    %1068 = vmatprep.subr.bf16.mxu0 %v792
    %1069 = vmatpush1.bf16.msra.mxu0 %v791
    %1070 = vmatprep.subr.bf16.mxu0 %v799
    %1071 = vmatpush1.bf16.msra.mxu0 %v798
    %1072 = vmatprep.subr.bf16.mxu0 %v806
    %1073 = vmatpush1.bf16.msra.mxu0 %v805
    %1074 = vmatprep.subr.bf16.mxu0 %v813
    %1075 = vmatpush1.bf16.msra.mxu0 %v812
    %1076 = vmatprep.subr.bf16.mxu0 %v820
    %1077 = vmatpush1.bf16.msra.mxu0 %v819
    %1078 = vmatprep.subr.bf16.mxu0 %v827
    %1079 = vmatpush1.bf16.msra.mxu0 %v826
    %1080 = vmatprep.subr.bf16.mxu0 %v834
    %1081 = vmatpush1.bf16.msra.mxu0 %v833
    %1082 = vmatprep.subr.bf16.mxu0 %v841
    %1083 = vmatpush1.bf16.msra.mxu0 %v840
    %1084 = vmatprep.subr.bf16.mxu0 %v848
    %1085 = vmatpush1.bf16.msra.mxu0 %v847
    %1086 = vmatprep.subr.bf16.mxu0 %v855
    %1087 = vmatpush1.bf16.msra.mxu0 %v854
    %1088 = vmatprep.subr.bf16.mxu0 %v862
    %1089 = vmatpush1.bf16.msra.mxu0 %v861
    %1090 = vmatprep.mubr.bf16.mxu0 %v234
    %1091 = vmatmul.mubr.bf16.gmra.mrb[0].mxu0 %v233
    %v1092 = vpop.f32.mrb[0].mxu0
    %v1093 = vadd.f32 %v384, %v1092
    %v1094 = vpop.f32.mrb[0].mxu0
    %v1095 = vadd.f32 %v388, %v1094
    %v1096 = vpop.f32.mrb[0].mxu0
    %v1097 = vpop.f32.mrb[0].mxu0
    %1098 = vdwg.mxu0
    %1099 = vmatprep.subr.bf16.mxu0 0
    %1100 = vmatpush1.bf16.msra.mxu0 %v758
    %1101 = vmatprep.subr.bf16.mxu0 0
    %1102 = vmatpush1.bf16.msra.mxu0 %v765
    %1103 = vmatprep.subr.bf16.mxu0 0
    %1104 = vmatpush1.bf16.msra.mxu0 %v772
    %1105 = vmatprep.subr.bf16.mxu0 0
    %1106 = vmatpush1.bf16.msra.mxu0 %v779
    %1107 = vmatprep.subr.bf16.mxu0 0
    %1108 = vmatpush1.bf16.msra.mxu0 %v786
    %1109 = vmatprep.subr.bf16.mxu0 0
    %1110 = vmatpush1.bf16.msra.mxu0 %v793
    %1111 = vmatprep.subr.bf16.mxu0 0
    %1112 = vmatpush1.bf16.msra.mxu0 %v800
    %1113 = vmatprep.subr.bf16.mxu0 0
    %1114 = vmatpush1.bf16.msra.mxu0 %v807
    %1115 = vmatprep.subr.bf16.mxu0 0
    %1116 = vmatpush1.bf16.msra.mxu0 %v814
    %1117 = vmatprep.subr.bf16.mxu0 0
    %1118 = vmatpush1.bf16.msra.mxu0 %v821
    %1119 = vmatprep.subr.bf16.mxu0 0
    %1120 = vmatpush1.bf16.msra.mxu0 %v828
    %1121 = vmatprep.subr.bf16.mxu0 0
    %1122 = vmatpush1.bf16.msra.mxu0 %v835
    %1123 = vmatprep.subr.bf16.mxu0 0
    %1124 = vmatpush1.bf16.msra.mxu0 %v842
    %1125 = vmatprep.subr.bf16.mxu0 0
    %1126 = vmatpush1.bf16.msra.mxu0 %v849
    %1127 = vmatprep.subr.bf16.mxu0 0
    %1128 = vmatpush1.bf16.msra.mxu0 %v856
    %1129 = vmatprep.subr.bf16.mxu0 0
    %1130 = vmatpush1.bf16.msra.mxu0 %v863
    %1131 = vmatprep.mubr.bf16.mxu0 %v234
    %1132 = vmatmul.mubr.bf16.gmra.mrb[0].mxu0 %v233
    %v1133 = vpop.f32.mrb[0].mxu0
    %v1134 = vadd.f32 %v392, %v1133
    %v1135 = vpop.f32.mrb[0].mxu0
    %v1136 = vpop.f32.mrb[0].mxu0
    %v1137 = vpop.f32.mrb[0].mxu0
    %1138 = vdwg.mxu0
    %v1139 = vtanh.pop %v1011
    %v1140 = vtanh.pop %v1013
    %v1141 = vtanh.pop %v1052
    %v1142 = vtanh.pop %v1054
    %v1143 = vtanh.pop %v1093
    %v1144 = vtanh.pop %v1095
    %v1145 = vtanh.pop %v1134
    %1146 = vst [vmem:[#allocation10] sm:$0xff] %v1139
    %1147 = vst [vmem:[#allocation10 + $0x8] sm:$0xff] %v1140
    %1148 = vst [vmem:[#allocation10 + $0x10] sm:$0xff] %v1141
    %1149 = vst [vmem:[#allocation10 + $0x18] sm:$0xff] %v1142
    %1150 = vst [vmem:[#allocation10 + $0x20] sm:$0xff] %v1143
    %1151 = vst [vmem:[#allocation10 + $0x28] sm:$0xff] %v1144
    %1152 = vst [vmem:[#allocation10 + $0x30] sm:$0xff] %v1145
    // Predicated region
    $region42: #{tpu_custom_call.1} parent=1 // pred_check
      _
    $region43: #{tpu_custom_call.1} parent=1 // pred_check_branch
      %1154 = sbr.rel (0) target = $region45
    $region44: #{tpu_custom_call.1} parent=1 // pred_region
      %s1156 = ssub.s32 896, 896
      %1157 = vsyncadd [#allocation4], %s1156
      %s1159 = sshll.u32 [#allocation10], 4
      %s1160 = int_to_ptr.vmem [resolvable:$true] %s1159
      %1162 = dma.vmem_to_hbm [thread:$0]  %s1160, 896, %s6, [#allocation4]
    $region45: #{tpu_custom_call.1} parent=1 // pred_fallthru
      _
    // Predicated region
    $region46: #{tpu_custom_call.1} parent=1 // pred_check
      _
    $region47: #{tpu_custom_call.1} parent=1 // pred_check_branch
      %1164 = sbr.rel (0) target = $region49
    $region48: #{tpu_custom_call.1} parent=1 // pred_region
      %1165 = dma.done [#allocation4], 896
    $region49: #{tpu_custom_call.1} parent=1 // pred_fallthru
      _
    %1166 = vsyncpa [#allocation3], 1
    %1167 = vsyncpa [#allocation6], 1
    %1168 = vsyncpa [#allocation9], 1
    %1169 = vsyncpa [#allocation4], 1

</llo_original>
